<compile_context>
chip_gen: v6e
topology: v6e:2x2x1
jax: 0.10.0
libtpu: 0.0.40
codegen_flags: <defaults>
</compile_context>

<pallas_src>
import functools
import math

import jax
import jax.numpy as jnp
from jax.experimental import pallas as pl
from jax.experimental.pallas import tpu as pltpu

_LANE = 128     # vreg lane width (pad feature dims to this)
_SUBLANE = 8    # f32 sublane count (pad batch dim to this)


def _round_up(n: int, m: int) -> int:
    return ((n + m - 1) // m) * m


# ---------------------------------------------------------------------------
# Fused kernel: entire decoder in one body, layer loop unrolled at trace time.
# ---------------------------------------------------------------------------
def _decoder_kernel(x_ref, *refs, n_layers: int):
    """refs = (w0, b0, w1, b1, ..., w_{L-1}, b_{L-1}, o_ref).

    x_ref : (TB, D0p)      f32 VMEM
    w_i   : (Dip, Dop)     bf16 VMEM (zero-padded)
    b_i   : (1, Dop)       f32 VMEM (zero-padded)
    o_ref : (TB, DLp)      f32 VMEM
    """
    o_ref = refs[-1]
    h = x_ref[...].astype(jnp.bfloat16)          # bf16 LHS for the MXU
    for i in range(n_layers):
        w = refs[2 * i][...]                     # bf16 weights
        b = refs[2 * i + 1][...]                 # f32 bias (1, Dop)
        y = jnp.dot(h, w, preferred_element_type=jnp.float32) + b
        if i < n_layers - 1:
            y = jnp.maximum(y, 0.0)              # f32 ReLU (VPU)
            h = y.astype(jnp.bfloat16)           # next layer's MXU LHS
        else:
            y = jax.nn.sigmoid(y)                # f32 sigmoid (EUP)
            o_ref[...] = y.astype(o_ref.dtype)


# ---------------------------------------------------------------------------
# Parameter init (PyTorch-style) + one-time padding / dtype preparation.
# ---------------------------------------------------------------------------
def init_decoder_params(key, x_dim: int, z_dim: int, hidden_dims: list[int]):
    """Logical f32 params: list of (W (fan_in, fan_out), b (fan_out,))."""
    dims = [z_dim] + list(hidden_dims) + [x_dim]
    params = []
    for i in range(len(dims) - 1):
        fan_in, fan_out = dims[i], dims[i + 1]
        key, kw, kb = jax.random.split(key, 3)
        bound = 1.0 / math.sqrt(fan_in)
        w = jax.random.uniform(kw, (fan_in, fan_out), jnp.float32, -bound, bound)
        b = jax.random.uniform(kb, (fan_out,), jnp.float32, -bound, bound)
        params.append((w, b))
    return params


def prepare_decoder_params(params):
    """Zero-pad every feature dim to 128 lanes; weights -> bf16, bias -> (1, Dp) f32."""
    prepared = []
    for w, b in params:
        din, dout = w.shape
        din_p, dout_p = _round_up(din, _LANE), _round_up(dout, _LANE)
        wp = jnp.zeros((din_p, dout_p), jnp.bfloat16)
        wp = wp.at[:din, :dout].set(w.astype(jnp.bfloat16))
        bp = jnp.zeros((1, dout_p), jnp.float32)
        bp = bp.at[:, :dout].set(b)
        prepared.append((wp, bp))
    return prepared


# ---------------------------------------------------------------------------
# Wrapper: pad batch, run the single fused pallas_call, slice the output.
# ---------------------------------------------------------------------------
def decoder_forward(z, prepared_params, x_dim: int):
    B, z_dim = z.shape
    d_in_p = prepared_params[0][0].shape[0]
    d_out_p = prepared_params[-1][0].shape[1]
    n_layers = len(prepared_params)

    # Batch padding + tiling: >= 8 sublanes, tile of up to 128 rows per step.
    b_pad = _round_up(max(B, _SUBLANE), _SUBLANE)
    tb = min(b_pad, 128)
    b_pad = _round_up(b_pad, tb)
    z_p = jnp.zeros((b_pad, d_in_p), jnp.float32).at[:B, :z_dim].set(z)

    in_specs = [pl.BlockSpec((tb, d_in_p), lambda i: (i, 0))]
    flat_params = []
    for w, b in prepared_params:
        in_specs.append(pl.BlockSpec(w.shape, lambda i: (0, 0)))
        in_specs.append(pl.BlockSpec(b.shape, lambda i: (0, 0)))
        flat_params += [w, b]

    kernel = functools.partial(_decoder_kernel, n_layers=n_layers)
    out_p = pl.pallas_call(
        kernel,
        out_shape=jax.ShapeDtypeStruct((b_pad, d_out_p), jnp.float32),
        grid_spec=pltpu.PrefetchScalarGridSpec(
            num_scalar_prefetch=0,
            grid=(b_pad // tb,),
            in_specs=in_specs,
            out_specs=pl.BlockSpec((tb, d_out_p), lambda i: (i, 0)),
        ),
        compiler_params=pltpu.CompilerParams(
            dimension_semantics=("parallel",),   # v7x: split batch across 2 TCs
        ),
    )(z_p, *flat_params)

    # Padded output columns hold sigmoid(0)=0.5; slice them (and padded rows) off.
    return out_p[:B, :x_dim]


# ---------------------------------------------------------------------------
# References for correctness checks.
# ---------------------------------------------------------------------------
def decoder_forward_ref_f32(z, params):
    """Plain-JAX f32 reference matching the PyTorch module exactly."""
    h = z
    n = len(params)
    for i, (w, b) in enumerate(params):
        h = h @ w + b
        h = jax.nn.sigmoid(h) if i == n - 1 else jnp.maximum(h, 0.0)
    return h


def decoder_forward_ref_bf16(z, prepared_params, x_dim: int):
    """Plain-JAX reference mirroring the kernel's bf16-MXU / f32-accumulate math."""
    B, z_dim = z.shape
    d_in_p = prepared_params[0][0].shape[0]
    h = jnp.zeros((B, d_in_p), jnp.float32).at[:, :z_dim].set(z).astype(jnp.bfloat16)
    n = len(prepared_params)
    for i, (w, b) in enumerate(prepared_params):
        y = jnp.dot(h, w, preferred_element_type=jnp.float32) + b
        if i < n - 1:
            h = jnp.maximum(y, 0.0).astype(jnp.bfloat16)
        else:
            y = jax.nn.sigmoid(y)
    return y[:, :x_dim]


if __name__ == "__main__":
    # Small shapes consistent with the module: Decoder(x_dim=64, z_dim=8, hidden_dims=[32, 32])
    B = 4
    x_dim, z_dim, hidden_dims = 64, 8, [32, 32]

    key = jax.random.PRNGKey(0)
    key_z, key_p = jax.random.split(key)
    z = jax.random.normal(key_z, (B, z_dim), jnp.float32)

    params = init_decoder_params(key_p, x_dim, z_dim, hidden_dims)
    prepared = prepare_decoder_params(params)   # one-time padding / bf16 cast

    out = decoder_forward(z, prepared, x_dim)
    out = jax.block_until_ready(out)
    assert out.shape == (B, x_dim)

    # Tight check vs a reference that mirrors the kernel's bf16/f32 numerics.
    ref_bf16 = decoder_forward_ref_bf16(z, prepared, x_dim)
    assert jnp.allclose(out, ref_bf16, atol=1e-5, rtol=1e-5), "mismatch vs bf16 reference"

    # Loose check vs the exact f32 PyTorch-equivalent reference (bf16 MXU operands).
    ref_f32 = decoder_forward_ref_f32(z, params)
    assert jnp.allclose(out, ref_f32, atol=2e-2, rtol=2e-2), "mismatch vs f32 reference"

    print("KERNEL_OK")
</pallas_src>

<mosaic_0001>
module attributes {stable_mosaic.version = 11 : i64} {
  func.func @_decoder_kernel(%arg0: i32, %arg1: memref<8x128xf32, #tpu.memory_space<vmem>>, %arg2: memref<128x128xbf16, #tpu.memory_space<vmem>>, %arg3: memref<1x128xf32, #tpu.memory_space<vmem>>, %arg4: memref<128x128xbf16, #tpu.memory_space<vmem>>, %arg5: memref<1x128xf32, #tpu.memory_space<vmem>>, %arg6: memref<128x128xbf16, #tpu.memory_space<vmem>>, %arg7: memref<1x128xf32, #tpu.memory_space<vmem>>, %arg8: memref<8x128xf32, #tpu.memory_space<vmem>>) attributes {dimension_semantics = [#tpu.dimension_semantics<parallel>], iteration_bounds = array<i64: 1>, scalar_prefetch = 0 : i64, scratch_operands = 0 : i64, tpu.core_type = #tpu.core_type<tc>, window_params = [{transform_indices = @transform_0, window_bounds = array<i64: 8, 128>}, {pipeline_mode = #tpu.pipeline_mode<synchronous>, transform_indices = @transform_1, window_bounds = array<i64: 128, 128>}, {pipeline_mode = #tpu.pipeline_mode<synchronous>, transform_indices = @transform_2, window_bounds = array<i64: 1, 128>}, {pipeline_mode = #tpu.pipeline_mode<synchronous>, transform_indices = @transform_3, window_bounds = array<i64: 128, 128>}, {pipeline_mode = #tpu.pipeline_mode<synchronous>, transform_indices = @transform_4, window_bounds = array<i64: 1, 128>}, {pipeline_mode = #tpu.pipeline_mode<synchronous>, transform_indices = @transform_5, window_bounds = array<i64: 128, 128>}, {pipeline_mode = #tpu.pipeline_mode<synchronous>, transform_indices = @transform_6, window_bounds = array<i64: 1, 128>}, {transform_indices = @transform_7, window_bounds = array<i64: 8, 128>}]} {
    %c0 = arith.constant 0 : index
    %c0_0 = arith.constant 0 : index
    %0 = vector.load %arg1[%c0, %c0_0] : memref<8x128xf32, #tpu.memory_space<vmem>>, vector<8x128xf32>
    %1 = arith.truncf %0 : vector<8x128xf32> to vector<8x128xbf16>
    %c0_1 = arith.constant 0 : index
    %c0_2 = arith.constant 0 : index
    %2 = vector.load %arg2[%c0_1, %c0_2] : memref<128x128xbf16, #tpu.memory_space<vmem>>, vector<128x128xbf16>
    %c0_3 = arith.constant 0 : index
    %c0_4 = arith.constant 0 : index
    %3 = vector.load %arg3[%c0_3, %c0_4] : memref<1x128xf32, #tpu.memory_space<vmem>>, vector<1x128xf32>
    %cst = arith.constant dense<0.000000e+00> : vector<8x128xf32>
    %4 = tpu.matmul %1, %2, %cst {dimension_numbers = #tpu.dot_dimension_numbers<[1], [0], [0], [1], [0, 0, 1, 1], [], []>} : vector<8x128xbf16>, vector<128x128xbf16>, vector<8x128xf32> -> vector<8x128xf32>
    %5 = vector.broadcast %3 : vector<1x128xf32> to vector<8x128xf32>
    %6 = arith.addf %4, %5 : vector<8x128xf32>
    %cst_5 = arith.constant 0.000000e+00 : f32
    %7 = vector.broadcast %cst_5 : f32 to vector<8x128xf32>
    %8 = arith.maximumf %6, %7 : vector<8x128xf32>
    %9 = arith.truncf %8 : vector<8x128xf32> to vector<8x128xbf16>
    %c0_6 = arith.constant 0 : index
    %c0_7 = arith.constant 0 : index
    %10 = vector.load %arg4[%c0_6, %c0_7] : memref<128x128xbf16, #tpu.memory_space<vmem>>, vector<128x128xbf16>
    %c0_8 = arith.constant 0 : index
    %c0_9 = arith.constant 0 : index
    %11 = vector.load %arg5[%c0_8, %c0_9] : memref<1x128xf32, #tpu.memory_space<vmem>>, vector<1x128xf32>
    %cst_10 = arith.constant dense<0.000000e+00> : vector<8x128xf32>
    %12 = tpu.matmul %9, %10, %cst_10 {dimension_numbers = #tpu.dot_dimension_numbers<[1], [0], [0], [1], [0, 0, 1, 1], [], []>} : vector<8x128xbf16>, vector<128x128xbf16>, vector<8x128xf32> -> vector<8x128xf32>
    %13 = vector.broadcast %11 : vector<1x128xf32> to vector<8x128xf32>
    %14 = arith.addf %12, %13 : vector<8x128xf32>
    %cst_11 = arith.constant 0.000000e+00 : f32
    %15 = vector.broadcast %cst_11 : f32 to vector<8x128xf32>
    %16 = arith.maximumf %14, %15 : vector<8x128xf32>
    %17 = arith.truncf %16 : vector<8x128xf32> to vector<8x128xbf16>
    %c0_12 = arith.constant 0 : index
    %c0_13 = arith.constant 0 : index
    %18 = vector.load %arg6[%c0_12, %c0_13] : memref<128x128xbf16, #tpu.memory_space<vmem>>, vector<128x128xbf16>
    %c0_14 = arith.constant 0 : index
    %c0_15 = arith.constant 0 : index
    %19 = vector.load %arg7[%c0_14, %c0_15] : memref<1x128xf32, #tpu.memory_space<vmem>>, vector<1x128xf32>
    %cst_16 = arith.constant dense<0.000000e+00> : vector<8x128xf32>
    %20 = tpu.matmul %17, %18, %cst_16 {dimension_numbers = #tpu.dot_dimension_numbers<[1], [0], [0], [1], [0, 0, 1, 1], [], []>} : vector<8x128xbf16>, vector<128x128xbf16>, vector<8x128xf32> -> vector<8x128xf32>
    %21 = vector.broadcast %19 : vector<1x128xf32> to vector<8x128xf32>
    %22 = arith.addf %20, %21 : vector<8x128xf32>
    %23 = arith.negf %22 : vector<8x128xf32>
    %24 = math.exp %23 : vector<8x128xf32>
    %cst_17 = arith.constant 1.000000e+00 : f32
    %25 = vector.broadcast %cst_17 : f32 to vector<8x128xf32>
    %26 = arith.addf %25, %24 : vector<8x128xf32>
    %27 = arith.divf %25, %26 : vector<8x128xf32>
    %c0_18 = arith.constant 0 : index
    %c0_19 = arith.constant 0 : index
    %28 = vector.load %arg8[%c0_18, %c0_19] : memref<8x128xf32, #tpu.memory_space<vmem>>, vector<8x128xf32>
    tpu.vector_store %arg8[%c0_18, %c0_19], %27 {strides = array<i32>} : memref<8x128xf32, #tpu.memory_space<vmem>>, vector<8x128xf32>,
    return
  }
  func.func @transform_0(%arg0: i32) -> (i32, i32) {
    %c0_i32 = arith.constant 0 : i32
    %c0_i32_0 = arith.constant 0 : i32
    return %arg0, %c0_i32 : i32, i32
  }
  func.func @transform_1(%arg0: i32) -> (i32, i32) {
    %c0_i32 = arith.constant 0 : i32
    %c0_i32_0 = arith.constant 0 : i32
    %c0_i32_1 = arith.constant 0 : i32
    return %c0_i32, %c0_i32_0 : i32, i32
  }
  func.func @transform_2(%arg0: i32) -> (i32, i32) {
    %c0_i32 = arith.constant 0 : i32
    %c0_i32_0 = arith.constant 0 : i32
    %c0_i32_1 = arith.constant 0 : i32
    return %c0_i32, %c0_i32_0 : i32, i32
  }
  func.func @transform_3(%arg0: i32) -> (i32, i32) {
    %c0_i32 = arith.constant 0 : i32
    %c0_i32_0 = arith.constant 0 : i32
    %c0_i32_1 = arith.constant 0 : i32
    return %c0_i32, %c0_i32_0 : i32, i32
  }
  func.func @transform_4(%arg0: i32) -> (i32, i32) {
    %c0_i32 = arith.constant 0 : i32
    %c0_i32_0 = arith.constant 0 : i32
    %c0_i32_1 = arith.constant 0 : i32
    return %c0_i32, %c0_i32_0 : i32, i32
  }
  func.func @transform_5(%arg0: i32) -> (i32, i32) {
    %c0_i32 = arith.constant 0 : i32
    %c0_i32_0 = arith.constant 0 : i32
    %c0_i32_1 = arith.constant 0 : i32
    return %c0_i32, %c0_i32_0 : i32, i32
  }
  func.func @transform_6(%arg0: i32) -> (i32, i32) {
    %c0_i32 = arith.constant 0 : i32
    %c0_i32_0 = arith.constant 0 : i32
    %c0_i32_1 = arith.constant 0 : i32
    return %c0_i32, %c0_i32_0 : i32, i32
  }
  func.func @transform_7(%arg0: i32) -> (i32, i32) {
    %c0_i32 = arith.constant 0 : i32
    %c0_i32_0 = arith.constant 0 : i32
    return %arg0, %c0_i32 : i32, i32
  }
}

</mosaic_0001>

<llo_original>
// kernel: tpu_custom_call.1
$region0: #{tpu_custom_call.1}
  #allocation0 [shape = 'u32[]', space=smem, size = 0x4, offset = 0x4, fixed_abs, tag = 'smem constant byte address 0x4 - core index']
  #allocation1 [shape = 'u32[144,128]{1,0:T(1,128)}', space=vmem, size = 0x12000, scoped, tag = 'internal scratch']
  %s0 = inlined_call_operand.hbm [shape: f32[8,128], index: 0, kind: input, shape index: {}]
  %s1 = inlined_call_operand.hbm [shape: bf16[128,128], index: 1, kind: input, shape index: {}]
  %s2 = inlined_call_operand.vmem [shape: f32[1,128], index: 2, kind: input, shape index: {}]
  %s3 = inlined_call_operand.hbm [shape: bf16[128,128], index: 3, kind: input, shape index: {}]
  %s4 = inlined_call_operand.vmem [shape: f32[1,128], index: 4, kind: input, shape index: {}]
  %s5 = inlined_call_operand.hbm [shape: bf16[128,128], index: 5, kind: input, shape index: {}]
  %s6 = inlined_call_operand.vmem [shape: f32[1,128], index: 6, kind: input, shape index: {}]
  %s7 = inlined_call_operand.hbm [shape: f32[8,128], index: 7, kind: output, shape index: {}]
  %s8 = sld [smem:[#allocation0]]
  $region54: #{tpu_custom_call.1} parent=0
    _
  %s10 = ssub.s32 1, %s8
  %s11 = scalar_select 0, %s10, %s8
  $region1: #{tpu_custom_call.1} parent=0
    #allocation2 [shape = 'u8[4096]{0}', space=vmem, size = 0x1000, scoped, tag = 'input window, operand 0, single buffered']
    #allocation3 [shape = 's32[1]{0}', space=sflag, size = 0x4, scoped, tag = 'scoped memory for tpu_custom_call.1']
    #allocation4 [shape = 's32[1]{0}', space=sflag, size = 0x4, scoped, tag = 'scoped memory for tpu_custom_call.1']
    #allocation5 [shape = 'u8[32768]{0}', space=vmem, size = 0x8000, scoped, tag = 'input window, operand 1, single buffered']
    #allocation6 [shape = 's32[1]{0}', space=sflag, size = 0x4, scoped, tag = 'scoped memory for tpu_custom_call.1']
    #allocation7 [shape = 'u8[32768]{0}', space=vmem, size = 0x8000, scoped, tag = 'input window, operand 3, single buffered']
    #allocation8 [shape = 'u8[32768]{0}', space=vmem, size = 0x8000, scoped, tag = 'input window, operand 5, single buffered']
    #allocation9 [shape = 's32[1]{0}', space=sflag, size = 0x4, scoped, tag = 'scoped memory for tpu_custom_call.1']
    #allocation10 [shape = 'u8[4096]{0}', space=vmem, size = 0x1000, scoped, tag = 'output window, operand 0, single buffered']
    %12 = vsyncpa [#allocation3], 0
    %13 = vsyncpa [#allocation6], 0
    %14 = vsyncpa [#allocation9], 0
    %15 = vsyncpa [#allocation4], 0
    // Predicated region
    $region2: #{tpu_custom_call.1} parent=1 // pred_check
      _
    $region3: #{tpu_custom_call.1} parent=1 // pred_check_branch
      %17 = sbr.rel (0) target = $region5
    $region4: #{tpu_custom_call.1} parent=1 // pred_region
      %s19 = ssub.s32 128, 128
      %20 = vsyncadd [#allocation3], %s19
      %s22 = sshll.u32 [#allocation2], 4
      %s23 = int_to_ptr.vmem [resolvable:$true] %s22
      %25 = dma.hbm_to_vmem [thread:$0]  %s0, 128, %s23, [#allocation3]
    $region5: #{tpu_custom_call.1} parent=1 // pred_fallthru
      _
    // Predicated region
    $region6: #{tpu_custom_call.1} parent=1 // pred_check
      _
    $region7: #{tpu_custom_call.1} parent=1 // pred_check_branch
      %27 = sbr.rel (0) target = $region9
    $region8: #{tpu_custom_call.1} parent=1 // pred_region
      %s29 = ssub.s32 1024, 1024
      %30 = vsyncadd [#allocation6], %s29
      %s31 = sshll.u32 [#allocation5], 4
      %s32 = int_to_ptr.vmem [resolvable:$true] %s31
      %37 = dma.hbm_to_vmem [thread:$0]  %s1, 1024, %s32, [#allocation6], 64, 64, 4
    $region9: #{tpu_custom_call.1} parent=1 // pred_fallthru
      _
    // Predicated region
    $region10: #{tpu_custom_call.1} parent=1 // pred_check
      _
    $region11: #{tpu_custom_call.1} parent=1 // pred_check_branch
      %39 = sbr.rel (0) target = $region13
    $region12: #{tpu_custom_call.1} parent=1 // pred_region
      _
    $region13: #{tpu_custom_call.1} parent=1 // pred_fallthru
      _
    // Predicated region
    $region14: #{tpu_custom_call.1} parent=1 // pred_check
      _
    $region15: #{tpu_custom_call.1} parent=1 // pred_check_branch
      %41 = sbr.rel (0) target = $region17
    $region16: #{tpu_custom_call.1} parent=1 // pred_region
      %s43 = ssub.s32 1024, 1024
      %44 = vsyncadd [#allocation6], %s43
      %s45 = sshll.u32 [#allocation7], 4
      %s46 = int_to_ptr.vmem [resolvable:$true] %s45
      %51 = dma.hbm_to_vmem [thread:$0]  %s3, 1024, %s46, [#allocation6], 64, 64, 4
    $region17: #{tpu_custom_call.1} parent=1 // pred_fallthru
      _
    // Predicated region
    $region18: #{tpu_custom_call.1} parent=1 // pred_check
      _
    $region19: #{tpu_custom_call.1} parent=1 // pred_check_branch
      %53 = sbr.rel (0) target = $region21
    $region20: #{tpu_custom_call.1} parent=1 // pred_region
      _
    $region21: #{tpu_custom_call.1} parent=1 // pred_fallthru
      _
    // Predicated region
    $region22: #{tpu_custom_call.1} parent=1 // pred_check
      _
    $region23: #{tpu_custom_call.1} parent=1 // pred_check_branch
      %55 = sbr.rel (0) target = $region25
    $region24: #{tpu_custom_call.1} parent=1 // pred_region
      %s57 = ssub.s32 1024, 1024
      %58 = vsyncadd [#allocation9], %s57
      %s59 = sshll.u32 [#allocation8], 4
      %s60 = int_to_ptr.vmem [resolvable:$true] %s59
      %65 = dma.hbm_to_vmem [thread:$0]  %s5, 1024, %s60, [#allocation9], 64, 64, 4
    $region25: #{tpu_custom_call.1} parent=1 // pred_fallthru
      _
    // Predicated region
    $region26: #{tpu_custom_call.1} parent=1 // pred_check
      _
    $region27: #{tpu_custom_call.1} parent=1 // pred_check_branch
      %67 = sbr.rel (0) target = $region29
    $region28: #{tpu_custom_call.1} parent=1 // pred_region
      _
    $region29: #{tpu_custom_call.1} parent=1 // pred_fallthru
      _
    // Predicated region
    $region30: #{tpu_custom_call.1} parent=1 // pred_check
      _
    $region31: #{tpu_custom_call.1} parent=1 // pred_check_branch
      %69 = sbr.rel (0) target = $region33
    $region32: #{tpu_custom_call.1} parent=1 // pred_region
      %70 = dma.done [#allocation3], 128
    $region33: #{tpu_custom_call.1} parent=1 // pred_fallthru
      _
    // Predicated region
    $region34: #{tpu_custom_call.1} parent=1 // pred_check
      _
    $region35: #{tpu_custom_call.1} parent=1 // pred_check_branch
      %72 = sbr.rel (0) target = $region37
    $region36: #{tpu_custom_call.1} parent=1 // pred_region
      %73 = dma.done [#allocation6], 1024
    $region37: #{tpu_custom_call.1} parent=1 // pred_fallthru
      _
    // Predicated region
    $region38: #{tpu_custom_call.1} parent=1 // pred_check
      _
    $region39: #{tpu_custom_call.1} parent=1 // pred_check_branch
      %75 = sbr.rel (0) target = $region41
    $region40: #{tpu_custom_call.1} parent=1 // pred_region
      %76 = dma.done [#allocation6], 1024
    $region41: #{tpu_custom_call.1} parent=1 // pred_fallthru
      _
    // Predicated region
    $region42: #{tpu_custom_call.1} parent=1 // pred_check
      _
    $region43: #{tpu_custom_call.1} parent=1 // pred_check_branch
      %78 = sbr.rel (0) target = $region45
    $region44: #{tpu_custom_call.1} parent=1 // pred_region
      %79 = dma.done [#allocation9], 1024
    $region45: #{tpu_custom_call.1} parent=1 // pred_fallthru
      _
    %v81 = vld [vmem:[#allocation2] sm:$0xff]
    %v82 = vpack.c.bf16 %v81, %v81
    %v83 = vld [vmem:[#allocation5] sm:$0xf]
    %v84 = vld [vmem:[#allocation5 + $0x4] sm:$0xf]
    %v85 = vld [vmem:[#allocation5 + $0x8] sm:$0xf]
    %v86 = vld [vmem:[#allocation5 + $0xc] sm:$0xf]
    %v87 = vld [vmem:[#allocation5 + $0x10] sm:$0xf]
    %v88 = vld [vmem:[#allocation5 + $0x14] sm:$0xf]
    %v89 = vld [vmem:[#allocation5 + $0x18] sm:$0xf]
    %v90 = vld [vmem:[#allocation5 + $0x1c] sm:$0xf]
    %v91 = vld [vmem:[#allocation5 + $0x20] sm:$0xf]
    %v92 = vld [vmem:[#allocation5 + $0x24] sm:$0xf]
    %v93 = vld [vmem:[#allocation5 + $0x28] sm:$0xf]
    %v94 = vld [vmem:[#allocation5 + $0x2c] sm:$0xf]
    %v95 = vld [vmem:[#allocation5 + $0x30] sm:$0xf]
    %v96 = vld [vmem:[#allocation5 + $0x34] sm:$0xf]
    %v97 = vld [vmem:[#allocation5 + $0x38] sm:$0xf]
    %v98 = vld [vmem:[#allocation5 + $0x3c] sm:$0xf]
    %v99 = vld [vmem:[%s2] sm:$0x1]
    %v101 = vlaneseq
    %v102 = vshrl.u32 %v101, 7
    %v103 = vsub.s32 0, %v102
    %v104 = vrot.slane %v99, %v103
    %v122 = vunpack.c.l.b16 %v83
    %v123 = vunpack.c.l.b16 %v84
    %v124 = vunpack.c.l.b16 %v85
    %v125 = vunpack.c.l.b16 %v86
    %v126 = vunpack.c.l.b16 %v87
    %v127 = vunpack.c.l.b16 %v88
    %v128 = vunpack.c.l.b16 %v89
    %v129 = vunpack.c.l.b16 %v90
    %v130 = vunpack.c.l.b16 %v91
    %v131 = vunpack.c.l.b16 %v92
    %v132 = vunpack.c.l.b16 %v93
    %v133 = vunpack.c.l.b16 %v94
    %v134 = vunpack.c.l.b16 %v95
    %v135 = vunpack.c.l.b16 %v96
    %v136 = vunpack.c.l.b16 %v97
    %v137 = vunpack.c.l.b16 %v98
    %v138 = vpack.c.b16 %v123, %v122
    %v139 = vpack.c.b16 %v125, %v124
    %v140 = vpack.c.b16 %v127, %v126
    %v141 = vpack.c.b16 %v129, %v128
    %v142 = vpack.c.b16 %v131, %v130
    %v143 = vpack.c.b16 %v133, %v132
    %v144 = vpack.c.b16 %v135, %v134
    %v145 = vpack.c.b16 %v137, %v136
    %154 = vmatprep.subr.bf16.mxu0 0
    %155 = vmatpush1.bf16.msra.mxu0 %v145
    %156 = vmatprep.subr.bf16.mxu0 0
    %157 = vmatpush1.bf16.msra.mxu0 %v144
    %158 = vmatprep.subr.bf16.mxu0 0
    %159 = vmatpush1.bf16.msra.mxu0 %v143
    %160 = vmatprep.subr.bf16.mxu0 0
    %161 = vmatpush1.bf16.msra.mxu0 %v142
    %162 = vmatprep.subr.bf16.mxu0 0
    %163 = vmatpush1.bf16.msra.mxu0 %v141
    %164 = vmatprep.subr.bf16.mxu0 0
    %165 = vmatpush1.bf16.msra.mxu0 %v140
    %166 = vmatprep.subr.bf16.mxu0 0
    %167 = vmatpush1.bf16.msra.mxu0 %v139
    %168 = vmatprep.subr.bf16.mxu0 0
    %169 = vmatpush1.bf16.msra.mxu0 %v138
    %170 = vmatprep.subr.bf16.mxu0 0
    %171 = vmatpush2.bf16.msra.mxu0 0
    %172 = vmatprep.subr.bf16.mxu0 0
    %173 = vmatpush2.bf16.msra.mxu0 0
    %174 = vmatprep.subr.bf16.mxu0 0
    %175 = vmatpush2.bf16.msra.mxu0 0
    %176 = vmatprep.subr.bf16.mxu0 0
    %177 = vmatpush2.bf16.msra.mxu0 0
    %178 = vmatprep.subr.bf16.mxu0 0
    %179 = vmatpush2.bf16.msra.mxu0 0
    %180 = vmatprep.subr.bf16.mxu0 0
    %181 = vmatpush2.bf16.msra.mxu0 0
    %182 = vmatprep.subr.bf16.mxu0 0
    %183 = vmatpush2.bf16.msra.mxu0 0
    %184 = vmatprep.subr.bf16.mxu0 0
    %185 = vmatpush2.bf16.msra.mxu0 0
    %186 = vmatprep.mubr.bf16.mxu0 0
    %187 = vmatmul.mubr.bf16.gmra.mxu0 %v82
    %v188 = vpop.f32.mrf.mxu0
    %v189 = vadd.f32 %v104, %v188
    %v190 = vpop.f32.mrf.mxu0
    %v191 = vpop.f32.mrf.mxu0
    %v192 = vpop.f32.mrf.mxu0
    %193 = vdwg.mxu0
    %v194 = vmax.f32 %v189, 0.0
    %v195 = vpack.c.bf16 %v194, %v194
    %v196 = vld [vmem:[#allocation7] sm:$0xf]
    %v197 = vld [vmem:[#allocation7 + $0x4] sm:$0xf]
    %v198 = vld [vmem:[#allocation7 + $0x8] sm:$0xf]
    %v199 = vld [vmem:[#allocation7 + $0xc] sm:$0xf]
    %v200 = vld [vmem:[#allocation7 + $0x10] sm:$0xf]
    %v201 = vld [vmem:[#allocation7 + $0x14] sm:$0xf]
    %v202 = vld [vmem:[#allocation7 + $0x18] sm:$0xf]
    %v203 = vld [vmem:[#allocation7 + $0x1c] sm:$0xf]
    %v204 = vld [vmem:[#allocation7 + $0x20] sm:$0xf]
    %v205 = vld [vmem:[#allocation7 + $0x24] sm:$0xf]
    %v206 = vld [vmem:[#allocation7 + $0x28] sm:$0xf]
    %v207 = vld [vmem:[#allocation7 + $0x2c] sm:$0xf]
    %v208 = vld [vmem:[#allocation7 + $0x30] sm:$0xf]
    %v209 = vld [vmem:[#allocation7 + $0x34] sm:$0xf]
    %v210 = vld [vmem:[#allocation7 + $0x38] sm:$0xf]
    %v211 = vld [vmem:[#allocation7 + $0x3c] sm:$0xf]
    %v212 = vld [vmem:[%s4] sm:$0x1]
    %v214 = vlaneseq
    %v215 = vshrl.u32 %v214, 7
    %v216 = vsub.s32 0, %v215
    %v217 = vrot.slane %v212, %v216
    %v235 = vunpack.c.l.b16 %v196
    %v236 = vunpack.c.l.b16 %v197
    %v237 = vunpack.c.l.b16 %v198
    %v238 = vunpack.c.l.b16 %v199
    %v239 = vunpack.c.l.b16 %v200
    %v240 = vunpack.c.l.b16 %v201
    %v241 = vunpack.c.l.b16 %v202
    %v242 = vunpack.c.l.b16 %v203
    %v243 = vunpack.c.l.b16 %v204
    %v244 = vunpack.c.l.b16 %v205
    %v245 = vunpack.c.l.b16 %v206
    %v246 = vunpack.c.l.b16 %v207
    %v247 = vunpack.c.l.b16 %v208
    %v248 = vunpack.c.l.b16 %v209
    %v249 = vunpack.c.l.b16 %v210
    %v250 = vunpack.c.l.b16 %v211
    %v251 = vpack.c.b16 %v236, %v235
    %v252 = vpack.c.b16 %v238, %v237
    %v253 = vpack.c.b16 %v240, %v239
    %v254 = vpack.c.b16 %v242, %v241
    %v255 = vpack.c.b16 %v244, %v243
    %v256 = vpack.c.b16 %v246, %v245
    %v257 = vpack.c.b16 %v248, %v247
    %v258 = vpack.c.b16 %v250, %v249
    %267 = vmatprep.subr.bf16.mxu0 0
    %268 = vmatpush1.bf16.msra.mxu0 %v258
    %269 = vmatprep.subr.bf16.mxu0 0
    %270 = vmatpush1.bf16.msra.mxu0 %v257
    %271 = vmatprep.subr.bf16.mxu0 0
    %272 = vmatpush1.bf16.msra.mxu0 %v256
    %273 = vmatprep.subr.bf16.mxu0 0
    %274 = vmatpush1.bf16.msra.mxu0 %v255
    %275 = vmatprep.subr.bf16.mxu0 0
    %276 = vmatpush1.bf16.msra.mxu0 %v254
    %277 = vmatprep.subr.bf16.mxu0 0
    %278 = vmatpush1.bf16.msra.mxu0 %v253
    %279 = vmatprep.subr.bf16.mxu0 0
    %280 = vmatpush1.bf16.msra.mxu0 %v252
    %281 = vmatprep.subr.bf16.mxu0 0
    %282 = vmatpush1.bf16.msra.mxu0 %v251
    %283 = vmatprep.subr.bf16.mxu0 0
    %284 = vmatpush2.bf16.msra.mxu0 0
    %285 = vmatprep.subr.bf16.mxu0 0
    %286 = vmatpush2.bf16.msra.mxu0 0
    %287 = vmatprep.subr.bf16.mxu0 0
    %288 = vmatpush2.bf16.msra.mxu0 0
    %289 = vmatprep.subr.bf16.mxu0 0
    %290 = vmatpush2.bf16.msra.mxu0 0
    %291 = vmatprep.subr.bf16.mxu0 0
    %292 = vmatpush2.bf16.msra.mxu0 0
    %293 = vmatprep.subr.bf16.mxu0 0
    %294 = vmatpush2.bf16.msra.mxu0 0
    %295 = vmatprep.subr.bf16.mxu0 0
    %296 = vmatpush2.bf16.msra.mxu0 0
    %297 = vmatprep.subr.bf16.mxu0 0
    %298 = vmatpush2.bf16.msra.mxu0 0
    %299 = vmatprep.mubr.bf16.mxu0 0
    %300 = vmatmul.mubr.bf16.gmra.mxu0 %v195
    %v301 = vpop.f32.mrf.mxu0
    %v302 = vadd.f32 %v217, %v301
    %v303 = vpop.f32.mrf.mxu0
    %v304 = vpop.f32.mrf.mxu0
    %v305 = vpop.f32.mrf.mxu0
    %306 = vdwg.mxu0
    %v307 = vmax.f32 %v302, 0.0
    %v308 = vpack.c.bf16 %v307, %v307
    %v309 = vld [vmem:[#allocation8] sm:$0xf]
    %v310 = vld [vmem:[#allocation8 + $0x4] sm:$0xf]
    %v311 = vld [vmem:[#allocation8 + $0x8] sm:$0xf]
    %v312 = vld [vmem:[#allocation8 + $0xc] sm:$0xf]
    %v313 = vld [vmem:[#allocation8 + $0x10] sm:$0xf]
    %v314 = vld [vmem:[#allocation8 + $0x14] sm:$0xf]
    %v315 = vld [vmem:[#allocation8 + $0x18] sm:$0xf]
    %v316 = vld [vmem:[#allocation8 + $0x1c] sm:$0xf]
    %v317 = vld [vmem:[#allocation8 + $0x20] sm:$0xf]
    %v318 = vld [vmem:[#allocation8 + $0x24] sm:$0xf]
    %v319 = vld [vmem:[#allocation8 + $0x28] sm:$0xf]
    %v320 = vld [vmem:[#allocation8 + $0x2c] sm:$0xf]
    %v321 = vld [vmem:[#allocation8 + $0x30] sm:$0xf]
    %v322 = vld [vmem:[#allocation8 + $0x34] sm:$0xf]
    %v323 = vld [vmem:[#allocation8 + $0x38] sm:$0xf]
    %v324 = vld [vmem:[#allocation8 + $0x3c] sm:$0xf]
    %v325 = vld [vmem:[%s6] sm:$0x1]
    %v327 = vlaneseq
    %v328 = vshrl.u32 %v327, 7
    %v329 = vsub.s32 0, %v328
    %v330 = vrot.slane %v325, %v329
    %v348 = vunpack.c.l.b16 %v309
    %v349 = vunpack.c.l.b16 %v310
    %v350 = vunpack.c.l.b16 %v311
    %v351 = vunpack.c.l.b16 %v312
    %v352 = vunpack.c.l.b16 %v313
    %v353 = vunpack.c.l.b16 %v314
    %v354 = vunpack.c.l.b16 %v315
    %v355 = vunpack.c.l.b16 %v316
    %v356 = vunpack.c.l.b16 %v317
    %v357 = vunpack.c.l.b16 %v318
    %v358 = vunpack.c.l.b16 %v319
    %v359 = vunpack.c.l.b16 %v320
    %v360 = vunpack.c.l.b16 %v321
    %v361 = vunpack.c.l.b16 %v322
    %v362 = vunpack.c.l.b16 %v323
    %v363 = vunpack.c.l.b16 %v324
    %v364 = vpack.c.b16 %v349, %v348
    %v365 = vpack.c.b16 %v351, %v350
    %v366 = vpack.c.b16 %v353, %v352
    %v367 = vpack.c.b16 %v355, %v354
    %v368 = vpack.c.b16 %v357, %v356
    %v369 = vpack.c.b16 %v359, %v358
    %v370 = vpack.c.b16 %v361, %v360
    %v371 = vpack.c.b16 %v363, %v362
    %380 = vmatprep.subr.bf16.mxu0 0
    %381 = vmatpush1.bf16.msra.mxu0 %v371
    %382 = vmatprep.subr.bf16.mxu0 0
    %383 = vmatpush1.bf16.msra.mxu0 %v370
    %384 = vmatprep.subr.bf16.mxu0 0
    %385 = vmatpush1.bf16.msra.mxu0 %v369
    %386 = vmatprep.subr.bf16.mxu0 0
    %387 = vmatpush1.bf16.msra.mxu0 %v368
    %388 = vmatprep.subr.bf16.mxu0 0
    %389 = vmatpush1.bf16.msra.mxu0 %v367
    %390 = vmatprep.subr.bf16.mxu0 0
    %391 = vmatpush1.bf16.msra.mxu0 %v366
    %392 = vmatprep.subr.bf16.mxu0 0
    %393 = vmatpush1.bf16.msra.mxu0 %v365
    %394 = vmatprep.subr.bf16.mxu0 0
    %395 = vmatpush1.bf16.msra.mxu0 %v364
    %396 = vmatprep.subr.bf16.mxu0 0
    %397 = vmatpush2.bf16.msra.mxu0 0
    %398 = vmatprep.subr.bf16.mxu0 0
    %399 = vmatpush2.bf16.msra.mxu0 0
    %400 = vmatprep.subr.bf16.mxu0 0
    %401 = vmatpush2.bf16.msra.mxu0 0
    %402 = vmatprep.subr.bf16.mxu0 0
    %403 = vmatpush2.bf16.msra.mxu0 0
    %404 = vmatprep.subr.bf16.mxu0 0
    %405 = vmatpush2.bf16.msra.mxu0 0
    %406 = vmatprep.subr.bf16.mxu0 0
    %407 = vmatpush2.bf16.msra.mxu0 0
    %408 = vmatprep.subr.bf16.mxu0 0
    %409 = vmatpush2.bf16.msra.mxu0 0
    %410 = vmatprep.subr.bf16.mxu0 0
    %411 = vmatpush2.bf16.msra.mxu0 0
    %412 = vmatprep.mubr.bf16.mxu0 0
    %413 = vmatmul.mubr.bf16.gmra.mxu0 %v308
    %v414 = vpop.f32.mrf.mxu0
    %v415 = vadd.f32 %v330, %v414
    %v416 = vpop.f32.mrf.mxu0
    %v417 = vpop.f32.mrf.mxu0
    %v418 = vpop.f32.mrf.mxu0
    %419 = vdwg.mxu0
    %v420 = vxor.u32 %v415, 2147483648
    %v421 = vmul.f32 %v420, 1.442695
    %v422 = vpow.pop %v421
    %v423 = vadd.f32 %v422, 1.0
    %v424 = vrcp.pop %v423
    %v425 = vmul.f32 1.0, %v424
    %426 = vst [vmem:[#allocation10] sm:$0xff] %v425
    // Predicated region
    $region46: #{tpu_custom_call.1} parent=1 // pred_check
      _
    $region47: #{tpu_custom_call.1} parent=1 // pred_check_branch
      %428 = sbr.rel (0) target = $region49
    $region48: #{tpu_custom_call.1} parent=1 // pred_region
      %s430 = ssub.s32 128, 128
      %431 = vsyncadd [#allocation4], %s430
      %s433 = sshll.u32 [#allocation10], 4
      %s434 = int_to_ptr.vmem [resolvable:$true] %s433
      %436 = dma.vmem_to_hbm [thread:$0]  %s434, 128, %s7, [#allocation4]
    $region49: #{tpu_custom_call.1} parent=1 // pred_fallthru
      _
    // Predicated region
    $region50: #{tpu_custom_call.1} parent=1 // pred_check
      _
    $region51: #{tpu_custom_call.1} parent=1 // pred_check_branch
      %438 = sbr.rel (0) target = $region53
    $region52: #{tpu_custom_call.1} parent=1 // pred_region
      %439 = dma.done [#allocation4], 128
    $region53: #{tpu_custom_call.1} parent=1 // pred_fallthru
      _
    %440 = vsyncpa [#allocation3], 1
    %441 = vsyncpa [#allocation6], 1
    %442 = vsyncpa [#allocation9], 1
    %443 = vsyncpa [#allocation4], 1

</llo_original>
